<compile_context>
chip_gen: v6e
topology: v6e:2x2x1
jax: 0.10.0
libtpu: 0.0.40
codegen_flags: <defaults>
</compile_context>

<pallas_src>
import jax
import jax.numpy as jnp
from jax.experimental import pallas as pl
from jax.experimental.pallas import tpu as pltpu


def _round_up(x, m):
    return ((x + m - 1) // m) * m


def _pad_rows(x, rows):
    b = x.shape[0]
    if rows == b:
        return x
    return jnp.pad(x, ((0, rows - b),) + ((0, 0),) * (x.ndim - 1))


def _make_kernel(embedding_dim, shared):
    D = embedding_dim

    def kernel(*refs):
        if shared:
            (u_ref, q_ref, ab_ref,
             w1_ref, b1_ref, w2_ref, b2_ref, w3t_ref, b3_ref,
             out_ref) = refs
        else:
            (u_ref, q_ref, us_ref, qs_ref, ab_ref,
             w1_ref, b1_ref, w2_ref, b2_ref, w3t_ref, b3_ref,
             out_ref) = refs

        f32 = jnp.float32
        u = u_ref[...]                      # (TB, D)
        q = q_ref[...]                      # (TB, D)

        # ---- prediction head: elementwise math in f32 (v5e VPU has no bf16) ----
        uq_f32 = u.astype(f32) * q.astype(f32)
        pred = jnp.sum(uq_f32, axis=1, keepdims=True) + ab_ref[...]   # (TB, 1)

        # ---- score head ----
        if shared:
            us, qs = u, q
            uqs_f32 = uq_f32                # reuse the elementwise product
        else:
            us, qs = us_ref[...], qs_ref[...]
            uqs_f32 = us.astype(f32) * qs.astype(f32)
        cd = us.dtype
        uqs = uqs_f32.astype(cd)

        # Linear(3D -> H1) without the lane-misaligned (TB, 3D) concat:
        # static (sublane-aligned) row slices of W1, partials summed on the VPU.
        h1 = (jnp.dot(us,  w1_ref[0:D, :],       preferred_element_type=f32)
              + jnp.dot(qs,  w1_ref[D:2 * D, :], preferred_element_type=f32)
              + jnp.dot(uqs, w1_ref[2 * D:3 * D, :], preferred_element_type=f32)
              + b1_ref[...])
        h1 = jnp.maximum(h1, 0.0)

        h2 = (jnp.dot(h1.astype(cd), w2_ref[...], preferred_element_type=f32)
              + b2_ref[...])
        h2 = jnp.maximum(h2, 0.0)

        # Linear(D -> 1): N=1 MXU matmul replaced by VPU multiply + row reduce.
        score = jnp.sum(h2 * w3t_ref[...], axis=1, keepdims=True) + b3_ref[...]

        # Single fused (TB, 2) output block: one writeback stream instead of two.
        out_ref[:, 0:1] = pred
        out_ref[:, 1:2] = score

    return kernel


def multitask_forward(user_ids, item_ids, params, embedding_sharing=True,
                      compute_dtype=jnp.float32, block_rows=1024):
    """Forward pass matching MultiTaskNet.forward.

    Returns (predictions, score), each of shape (batch,) float32.
    """
    f32 = jnp.float32

    # ---- embedding gathers (plain-JAX glue) ----
    # TODO(synk): these gathers round-trip the (B, D) rows through HBM before
    # the kernel reads them back; an in-kernel gather (scalar-prefetched ids +
    # per-row DMAs) is not worthwhile for 128-byte rows, so the gather stays
    # in XLA.
    u_pred = params["U_predictions"][user_ids].astype(compute_dtype)   # (B, D)
    q_pred = params["Q_predictions"][item_ids].astype(compute_dtype)   # (B, D)
    ab = (params["A"][user_ids] + params["B"][item_ids]).astype(f32)   # (B, 1)
    if not embedding_sharing:
        u_sc = params["U_score"][user_ids].astype(compute_dtype)
        q_sc = params["Q_score"][item_ids].astype(compute_dtype)

    B, D = u_pred.shape
    w1 = params["W1"].astype(compute_dtype)          # (3D, H1)
    b1 = params["b1"].astype(f32)                    # (1, H1)
    w2 = params["W2"].astype(compute_dtype)          # (H1, D)
    b2 = params["b2"].astype(f32)                    # (1, D)
    w3t = params["W3"].T.astype(f32)                 # (1, D)  (VPU path, f32)
    b3 = params["b3"].astype(f32)                    # (1, 1)

    # ---- batch tiling: 8-row aligned tile, batch padded to the tile multiple ----
    TB = _round_up(min(block_rows, _round_up(B, 8)), 8)
    Bp = _round_up(B, TB)

    pad = lambda x: _pad_rows(x, Bp)
    row_spec = pl.BlockSpec((TB, D), lambda i: (i, 0))
    col_spec = pl.BlockSpec((TB, 1), lambda i: (i, 0))
    out_spec = pl.BlockSpec((TB, 2), lambda i: (i, 0))
    # Constant index_map => block fetched once, stays VMEM-resident across steps.
    resident = lambda arr: pl.BlockSpec(arr.shape, lambda i: (0, 0))

    arrays = [pad(u_pred), pad(q_pred)]
    specs = [row_spec, row_spec]
    if not embedding_sharing:
        arrays += [pad(u_sc), pad(q_sc)]
        specs += [row_spec, row_spec]
    arrays += [pad(ab), w1, b1, w2, b2, w3t, b3]
    specs += [col_spec] + [resident(a) for a in (w1, b1, w2, b2, w3t, b3)]

    out2d = pl.pallas_call(
        _make_kernel(D, embedding_sharing),
        grid=(Bp // TB,),
        in_specs=specs,
        out_specs=out_spec,
        out_shape=jax.ShapeDtypeStruct((Bp, 2), f32),
        compiler_params=pltpu.CompilerParams(
            dimension_semantics=("parallel",)),    # megacore sharding on v7x
    )(*arrays)

    # TODO(synk): the (Bp, 2) output is lane-sparse (masked vst); a fully
    # lane-dense (grid, TB) slab would need an in-kernel sublane->lane
    # relayout and the store slot is not the binding unit here.
    return out2d[:B, 0], out2d[:B, 1]


def init_params(key, num_users, num_items, embedding_dim=32, layer_sizes=(96, 64)):
    """Deterministic parameter init mirroring the PyTorch module's shapes/init."""
    ks = jax.random.split(key, 8)
    f32 = jnp.float32
    std = 1.0 / embedding_dim

    def linear(kw, kb, fan_in, fan_out):
        bound = 1.0 / jnp.sqrt(fan_in)
        # stored as (in, out) = PyTorch weight.T, bias as (1, out)
        w = jax.random.uniform(kw, (fan_in, fan_out), f32, -bound, bound)
        b = jax.random.uniform(kb, (1, fan_out), f32, -bound, bound)
        return w, b

    w1, b1 = linear(ks[4], ks[5], layer_sizes[0], layer_sizes[1])
    w2, b2 = linear(ks[6], ks[7], layer_sizes[1], embedding_dim)
    k8, k9 = jax.random.split(ks[0], 2)
    w3, b3 = linear(k8, k9, embedding_dim, 1)

    return {
        # ScaledEmbedding: normal(0, 1/embedding_dim)
        "U_predictions": std * jax.random.normal(ks[1], (num_users, embedding_dim), f32),
        "Q_predictions": std * jax.random.normal(ks[2], (num_items, embedding_dim), f32),
        "U_score":       std * jax.random.normal(ks[3], (num_users, embedding_dim), f32),
        "Q_score":       std * jax.random.normal(jax.random.fold_in(ks[3], 1),
                                                 (num_items, embedding_dim), f32),
        # ZeroEmbedding: zeros
        "A": jnp.zeros((num_users, 1), f32),
        "B": jnp.zeros((num_items, 1), f32),
        "W1": w1, "b1": b1, "W2": w2, "b2": b2, "W3": w3, "b3": b3,
    }


if __name__ == "__main__":
    key = jax.random.PRNGKey(0)
    num_users, num_items, embedding_dim = 16, 24, 32
    batch = 8

    params = init_params(key, num_users, num_items, embedding_dim, (96, 64))

    ku, ki = jax.random.split(jax.random.fold_in(key, 7))
    user_ids = jax.random.randint(ku, (batch,), 0, num_users, dtype=jnp.int32)
    item_ids = jax.random.randint(ki, (batch,), 0, num_items, dtype=jnp.int32)

    def reference(uids, iids, shared):
        u = params["U_predictions"][uids]
        q = params["Q_predictions"][iids]
        a = params["A"][uids].reshape(-1)
        b = params["B"][iids].reshape(-1)
        pred = (u * q).sum(axis=1) + a + b
        if shared:
            us, qs = u, q
        else:
            us = params["U_score"][uids]
            qs = params["Q_score"][iids]
        x = jnp.concatenate([us, qs, us * qs], axis=1)
        h = jnp.maximum(x @ params["W1"] + params["b1"], 0.0)
        h = jnp.maximum(h @ params["W2"] + params["b2"], 0.0)
        return pred, (h @ params["W3"] + params["b3"]).reshape(-1)

    # f32, shared embeddings, single tile
    p, s = multitask_forward(user_ids, item_ids, params, True, jnp.float32)
    jax.block_until_ready((p, s))
    rp, rs = reference(user_ids, item_ids, True)
    assert p.shape == (batch,) and s.shape == (batch,)
    assert jnp.allclose(p, rp, atol=1e-5)
    assert jnp.allclose(s, rs, atol=1e-5)

    # f32, separate score embeddings (embedding_sharing=False path)
    p2, s2 = multitask_forward(user_ids, item_ids, params, False, jnp.float32)
    jax.block_until_ready((p2, s2))
    rp2, rs2 = reference(user_ids, item_ids, False)
    assert jnp.allclose(p2, rp2, atol=1e-5)
    assert jnp.allclose(s2, rs2, atol=1e-5)

    # bf16 compute, multi-tile grid with a padded remainder (batch % TB != 0)
    big_b = 200
    ku2, ki2 = jax.random.split(jax.random.fold_in(key, 11))
    uids = jax.random.randint(ku2, (big_b,), 0, num_users, dtype=jnp.int32)
    iids = jax.random.randint(ki2, (big_b,), 0, num_items, dtype=jnp.int32)
    p3, s3 = multitask_forward(uids, iids, params, True, jnp.bfloat16,
                               block_rows=64)
    jax.block_until_ready((p3, s3))
    rp3, rs3 = reference(uids, iids, True)
    assert p3.shape == (big_b,) and s3.shape == (big_b,)
    assert jnp.allclose(p3, rp3, atol=1e-2, rtol=5e-2)
    assert jnp.allclose(s3, rs3, atol=1e-2, rtol=5e-2)

    print("KERNEL_OK")
</pallas_src>

<mosaic_0001>
module attributes {stable_mosaic.version = 11 : i64} {
  func.func @kernel(%arg0: i32, %arg1: memref<8x32xf32, #tpu.memory_space<vmem>>, %arg2: memref<8x32xf32, #tpu.memory_space<vmem>>, %arg3: memref<8x1xf32, #tpu.memory_space<vmem>>, %arg4: memref<96x64xf32, #tpu.memory_space<vmem>>, %arg5: memref<1x64xf32, #tpu.memory_space<vmem>>, %arg6: memref<64x32xf32, #tpu.memory_space<vmem>>, %arg7: memref<1x32xf32, #tpu.memory_space<vmem>>, %arg8: memref<1x32xf32, #tpu.memory_space<vmem>>, %arg9: memref<1x1xf32, #tpu.memory_space<vmem>>, %arg10: memref<8x2xf32, #tpu.memory_space<vmem>>) attributes {dimension_semantics = [#tpu.dimension_semantics<parallel>], iteration_bounds = array<i64: 1>, scalar_prefetch = 0 : i64, scratch_operands = 0 : i64, tpu.core_type = #tpu.core_type<tc>, window_params = [{transform_indices = @transform_0, window_bounds = array<i64: 8, 32>}, {transform_indices = @transform_1, window_bounds = array<i64: 8, 32>}, {transform_indices = @transform_2, window_bounds = array<i64: 8, 1>}, {pipeline_mode = #tpu.pipeline_mode<synchronous>, transform_indices = @transform_3, window_bounds = array<i64: 96, 64>}, {pipeline_mode = #tpu.pipeline_mode<synchronous>, transform_indices = @transform_4, window_bounds = array<i64: 1, 64>}, {pipeline_mode = #tpu.pipeline_mode<synchronous>, transform_indices = @transform_5, window_bounds = array<i64: 64, 32>}, {pipeline_mode = #tpu.pipeline_mode<synchronous>, transform_indices = @transform_6, window_bounds = array<i64: 1, 32>}, {pipeline_mode = #tpu.pipeline_mode<synchronous>, transform_indices = @transform_7, window_bounds = array<i64: 1, 32>}, {pipeline_mode = #tpu.pipeline_mode<synchronous>, transform_indices = @transform_8, window_bounds = array<i64: 1, 1>}, {transform_indices = @transform_9, window_bounds = array<i64: 8, 2>}]} {
    %c0 = arith.constant 0 : index
    %c0_0 = arith.constant 0 : index
    %0 = vector.load %arg1[%c0, %c0_0] : memref<8x32xf32, #tpu.memory_space<vmem>>, vector<8x32xf32>
    %c0_1 = arith.constant 0 : index
    %c0_2 = arith.constant 0 : index
    %1 = vector.load %arg2[%c0_1, %c0_2] : memref<8x32xf32, #tpu.memory_space<vmem>>, vector<8x32xf32>
    %2 = arith.mulf %0, %1 : vector<8x32xf32>
    %cst = arith.constant dense<0.000000e+00> : vector<8xf32>
    %3 = vector.multi_reduction <add>, %2, %cst [1] : vector<8x32xf32> to vector<8xf32>
    %4 = vector.shape_cast %3 : vector<8xf32> to vector<8x1xf32>
    %c0_3 = arith.constant 0 : index
    %c0_4 = arith.constant 0 : index
    %5 = vector.load %arg3[%c0_3, %c0_4] : memref<8x1xf32, #tpu.memory_space<vmem>>, vector<8x1xf32>
    %6 = arith.addf %4, %5 : vector<8x1xf32>
    %c0_5 = arith.constant 0 : index
    %c0_6 = arith.constant 0 : index
    %7 = vector.load %arg4[%c0_5, %c0_6] : memref<96x64xf32, #tpu.memory_space<vmem>>, vector<32x64xf32>
    %cst_7 = arith.constant dense<0.000000e+00> : vector<8x64xf32>
    %8 = tpu.matmul %0, %7, %cst_7 {dimension_numbers = #tpu.dot_dimension_numbers<[1], [0], [0], [1], [0, 0, 1, 1], [], []>} : vector<8x32xf32>, vector<32x64xf32>, vector<8x64xf32> -> vector<8x64xf32>
    %c32 = arith.constant 32 : index
    %c0_8 = arith.constant 0 : index
    %9 = vector.load %arg4[%c32, %c0_8] : memref<96x64xf32, #tpu.memory_space<vmem>>, vector<32x64xf32>
    %cst_9 = arith.constant dense<0.000000e+00> : vector<8x64xf32>
    %10 = tpu.matmul %1, %9, %cst_9 {dimension_numbers = #tpu.dot_dimension_numbers<[1], [0], [0], [1], [0, 0, 1, 1], [], []>} : vector<8x32xf32>, vector<32x64xf32>, vector<8x64xf32> -> vector<8x64xf32>
    %11 = arith.addf %8, %10 : vector<8x64xf32>
    %c64 = arith.constant 64 : index
    %c0_10 = arith.constant 0 : index
    %12 = vector.load %arg4[%c64, %c0_10] : memref<96x64xf32, #tpu.memory_space<vmem>>, vector<32x64xf32>
    %cst_11 = arith.constant dense<0.000000e+00> : vector<8x64xf32>
    %13 = tpu.matmul %2, %12, %cst_11 {dimension_numbers = #tpu.dot_dimension_numbers<[1], [0], [0], [1], [0, 0, 1, 1], [], []>} : vector<8x32xf32>, vector<32x64xf32>, vector<8x64xf32> -> vector<8x64xf32>
    %14 = arith.addf %11, %13 : vector<8x64xf32>
    %c0_12 = arith.constant 0 : index
    %c0_13 = arith.constant 0 : index
    %15 = vector.load %arg5[%c0_12, %c0_13] : memref<1x64xf32, #tpu.memory_space<vmem>>, vector<1x64xf32>
    %16 = vector.broadcast %15 : vector<1x64xf32> to vector<8x64xf32>
    %17 = arith.addf %14, %16 : vector<8x64xf32>
    %cst_14 = arith.constant 0.000000e+00 : f32
    %18 = vector.broadcast %cst_14 : f32 to vector<8x64xf32>
    %19 = arith.maximumf %17, %18 : vector<8x64xf32>
    %c0_15 = arith.constant 0 : index
    %c0_16 = arith.constant 0 : index
    %20 = vector.load %arg6[%c0_15, %c0_16] : memref<64x32xf32, #tpu.memory_space<vmem>>, vector<64x32xf32>
    %cst_17 = arith.constant dense<0.000000e+00> : vector<8x32xf32>
    %21 = tpu.matmul %19, %20, %cst_17 {dimension_numbers = #tpu.dot_dimension_numbers<[1], [0], [0], [1], [0, 0, 1, 1], [], []>} : vector<8x64xf32>, vector<64x32xf32>, vector<8x32xf32> -> vector<8x32xf32>
    %c0_18 = arith.constant 0 : index
    %c0_19 = arith.constant 0 : index
    %22 = vector.load %arg7[%c0_18, %c0_19] : memref<1x32xf32, #tpu.memory_space<vmem>>, vector<1x32xf32>
    %23 = vector.broadcast %22 : vector<1x32xf32> to vector<8x32xf32>
    %24 = arith.addf %21, %23 : vector<8x32xf32>
    %cst_20 = arith.constant 0.000000e+00 : f32
    %25 = vector.broadcast %cst_20 : f32 to vector<8x32xf32>
    %26 = arith.maximumf %24, %25 : vector<8x32xf32>
    %c0_21 = arith.constant 0 : index
    %c0_22 = arith.constant 0 : index
    %27 = vector.load %arg8[%c0_21, %c0_22] : memref<1x32xf32, #tpu.memory_space<vmem>>, vector<1x32xf32>
    %28 = vector.broadcast %27 : vector<1x32xf32> to vector<8x32xf32>
    %29 = arith.mulf %26, %28 : vector<8x32xf32>
    %cst_23 = arith.constant dense<0.000000e+00> : vector<8xf32>
    %30 = vector.multi_reduction <add>, %29, %cst_23 [1] : vector<8x32xf32> to vector<8xf32>
    %31 = vector.shape_cast %30 : vector<8xf32> to vector<8x1xf32>
    %c0_24 = arith.constant 0 : index
    %c0_25 = arith.constant 0 : index
    %32 = vector.load %arg9[%c0_24, %c0_25] : memref<1x1xf32, #tpu.memory_space<vmem>>, vector<1x1xf32>
    %33 = vector.broadcast %32 : vector<1x1xf32> to vector<8x1xf32>
    %34 = arith.addf %31, %33 : vector<8x1xf32>
    %c0_26 = arith.constant 0 : index
    %c0_27 = arith.constant 0 : index
    %35 = vector.load %arg10[%c0_26, %c0_27] : memref<8x2xf32, #tpu.memory_space<vmem>>, vector<8x1xf32>
    tpu.vector_store %arg10[%c0_26, %c0_27], %6 {strides = array<i32>} : memref<8x2xf32, #tpu.memory_space<vmem>>, vector<8x1xf32>,
    %c0_28 = arith.constant 0 : index
    %c1 = arith.constant 1 : index
    %36 = vector.load %arg10[%c0_28, %c1] : memref<8x2xf32, #tpu.memory_space<vmem>>, vector<8x1xf32>
    tpu.vector_store %arg10[%c0_28, %c1], %34 {strides = array<i32>} : memref<8x2xf32, #tpu.memory_space<vmem>>, vector<8x1xf32>,
    return
  }
  func.func @transform_0(%arg0: i32) -> (i32, i32) {
    %c0_i32 = arith.constant 0 : i32
    %c0_i32_0 = arith.constant 0 : i32
    return %arg0, %c0_i32 : i32, i32
  }
  func.func @transform_1(%arg0: i32) -> (i32, i32) {
    %c0_i32 = arith.constant 0 : i32
    %c0_i32_0 = arith.constant 0 : i32
    return %arg0, %c0_i32 : i32, i32
  }
  func.func @transform_2(%arg0: i32) -> (i32, i32) {
    %c0_i32 = arith.constant 0 : i32
    %c0_i32_0 = arith.constant 0 : i32
    return %arg0, %c0_i32 : i32, i32
  }
  func.func @transform_3(%arg0: i32) -> (i32, i32) {
    %c0_i32 = arith.constant 0 : i32
    %c0_i32_0 = arith.constant 0 : i32
    %c0_i32_1 = arith.constant 0 : i32
    return %c0_i32, %c0_i32_0 : i32, i32
  }
  func.func @transform_4(%arg0: i32) -> (i32, i32) {
    %c0_i32 = arith.constant 0 : i32
    %c0_i32_0 = arith.constant 0 : i32
    %c0_i32_1 = arith.constant 0 : i32
    return %c0_i32, %c0_i32_0 : i32, i32
  }
  func.func @transform_5(%arg0: i32) -> (i32, i32) {
    %c0_i32 = arith.constant 0 : i32
    %c0_i32_0 = arith.constant 0 : i32
    %c0_i32_1 = arith.constant 0 : i32
    return %c0_i32, %c0_i32_0 : i32, i32
  }
  func.func @transform_6(%arg0: i32) -> (i32, i32) {
    %c0_i32 = arith.constant 0 : i32
    %c0_i32_0 = arith.constant 0 : i32
    %c0_i32_1 = arith.constant 0 : i32
    return %c0_i32, %c0_i32_0 : i32, i32
  }
  func.func @transform_7(%arg0: i32) -> (i32, i32) {
    %c0_i32 = arith.constant 0 : i32
    %c0_i32_0 = arith.constant 0 : i32
    %c0_i32_1 = arith.constant 0 : i32
    return %c0_i32, %c0_i32_0 : i32, i32
  }
  func.func @transform_8(%arg0: i32) -> (i32, i32) {
    %c0_i32 = arith.constant 0 : i32
    %c0_i32_0 = arith.constant 0 : i32
    %c0_i32_1 = arith.constant 0 : i32
    return %c0_i32, %c0_i32_0 : i32, i32
  }
  func.func @transform_9(%arg0: i32) -> (i32, i32) {
    %c0_i32 = arith.constant 0 : i32
    %c0_i32_0 = arith.constant 0 : i32
    return %arg0, %c0_i32 : i32, i32
  }
}

</mosaic_0001>

<llo_original>
// kernel: tpu_custom_call.1
$region0: #{tpu_custom_call.1}
  #allocation0 [shape = 'u32[]', space=smem, size = 0x4, offset = 0x4, fixed_abs, tag = 'smem constant byte address 0x4 - core index']
  #allocation1 [shape = 'u32[144,128]{1,0:T(1,128)}', space=vmem, size = 0x12000, scoped, tag = 'internal scratch']
  #allocation2 [shape = 'f32[1,1]{1,0:T(1,128)S(1)}', space=vmem, size = 0x200, scoped, tag = 'scoped memory for tpu_custom_call.1']
  %s0 = inlined_call_operand.vmem [shape: f32[8,32], index: 0, kind: input, shape index: {}]
  %s1 = inlined_call_operand.vmem [shape: f32[8,32], index: 1, kind: input, shape index: {}]
  %s2 = inlined_call_operand.vmem [shape: f32[8,1], index: 2, kind: input, shape index: {}]
  %s3 = inlined_call_operand.vmem [shape: f32[96,64], index: 3, kind: input, shape index: {}]
  %s4 = inlined_call_operand.vmem [shape: f32[1,64], index: 4, kind: input, shape index: {}]
  %s5 = inlined_call_operand.vmem [shape: f32[64,32], index: 5, kind: input, shape index: {}]
  %s6 = inlined_call_operand.vmem [shape: f32[1,32], index: 6, kind: input, shape index: {}]
  %s7 = inlined_call_operand.vmem [shape: f32[1,32], index: 7, kind: input, shape index: {}]
  %s8 = inlined_call_operand.<no memory space> [shape: f32[1,1], index: 8, kind: input, shape index: {}]
  %s9 = inlined_call_operand.vmem [shape: f32[8,2], index: 9, kind: output, shape index: {}]
  %s10 = sld [smem:[#allocation0]]
  $region46: #{tpu_custom_call.1} parent=0
    _
  %s12 = ssub.s32 1, %s10
  %s13 = scalar_select 0, %s12, %s10
  %v14 = vstv %s8
  %15 = vst [vmem:[#allocation2] sm:$0x1] %v14
  // Predicated region
  $region2: #{tpu_custom_call.1} parent=0 // pred_check
    _
  $region3: #{tpu_custom_call.1} parent=0 // pred_check_branch
    %17 = sbr.rel (0) target = $region5
  $region4: #{tpu_custom_call.1} parent=0 // pred_region
    _
  $region5: #{tpu_custom_call.1} parent=0 // pred_fallthru
    _
  // Predicated region
  $region6: #{tpu_custom_call.1} parent=0 // pred_check
    _
  $region7: #{tpu_custom_call.1} parent=0 // pred_check_branch
    %19 = sbr.rel (0) target = $region9
  $region8: #{tpu_custom_call.1} parent=0 // pred_region
    _
  $region9: #{tpu_custom_call.1} parent=0 // pred_fallthru
    _
  // Predicated region
  $region10: #{tpu_custom_call.1} parent=0 // pred_check
    _
  $region11: #{tpu_custom_call.1} parent=0 // pred_check_branch
    %21 = sbr.rel (0) target = $region13
  $region12: #{tpu_custom_call.1} parent=0 // pred_region
    _
  $region13: #{tpu_custom_call.1} parent=0 // pred_fallthru
    _
  // Predicated region
  $region14: #{tpu_custom_call.1} parent=0 // pred_check
    _
  $region15: #{tpu_custom_call.1} parent=0 // pred_check_branch
    %23 = sbr.rel (0) target = $region17
  $region16: #{tpu_custom_call.1} parent=0 // pred_region
    _
  $region17: #{tpu_custom_call.1} parent=0 // pred_fallthru
    _
  // Predicated region
  $region18: #{tpu_custom_call.1} parent=0 // pred_check
    _
  $region19: #{tpu_custom_call.1} parent=0 // pred_check_branch
    %25 = sbr.rel (0) target = $region21
  $region20: #{tpu_custom_call.1} parent=0 // pred_region
    _
  $region21: #{tpu_custom_call.1} parent=0 // pred_fallthru
    _
  // Predicated region
  $region22: #{tpu_custom_call.1} parent=0 // pred_check
    _
  $region23: #{tpu_custom_call.1} parent=0 // pred_check_branch
    %27 = sbr.rel (0) target = $region25
  $region24: #{tpu_custom_call.1} parent=0 // pred_region
    _
  $region25: #{tpu_custom_call.1} parent=0 // pred_fallthru
    _
  // Predicated region
  $region26: #{tpu_custom_call.1} parent=0 // pred_check
    _
  $region27: #{tpu_custom_call.1} parent=0 // pred_check_branch
    %29 = sbr.rel (0) target = $region29
  $region28: #{tpu_custom_call.1} parent=0 // pred_region
    _
  $region29: #{tpu_custom_call.1} parent=0 // pred_fallthru
    _
  // Predicated region
  $region30: #{tpu_custom_call.1} parent=0 // pred_check
    _
  $region31: #{tpu_custom_call.1} parent=0 // pred_check_branch
    %31 = sbr.rel (0) target = $region33
  $region32: #{tpu_custom_call.1} parent=0 // pred_region
    _
  $region33: #{tpu_custom_call.1} parent=0 // pred_fallthru
    _
  // Predicated region
  $region34: #{tpu_custom_call.1} parent=0 // pred_check
    _
  $region35: #{tpu_custom_call.1} parent=0 // pred_check_branch
    %33 = sbr.rel (0) target = $region37
  $region36: #{tpu_custom_call.1} parent=0 // pred_region
    _
  $region37: #{tpu_custom_call.1} parent=0 // pred_fallthru
    _
  %v34 = vld [vmem:[%s0] sm:$0xff]
  %v35 = vld [vmem:[%s1] sm:$0xff]
  %v36 = vmul.f32 %v34, %v35
  %vm37 = vcmask 261120
  %v38 = vsel %vm37, %v36, 0.0
  %39 = vadd.xlane.f32.xlu0 %v38
  %v40 = vpop.xlane.xlu0 %39
  %v41 = vld [vmem:[%s2] sm:$0xff]
  %v42 = vadd.f32 %v40, %v41
  %v43 = vld [vmem:[%s3] sm:$0xff]
  %v44 = vld [vmem:[%s3 + $0x8] sm:$0xff]
  %v45 = vld [vmem:[%s3 + $0x10] sm:$0xff]
  %v46 = vld [vmem:[%s3 + $0x18] sm:$0xff]
  %v47 = vld [vmem:[%s3 + $0x20] sm:$0xff]
  %v48 = vld [vmem:[%s3 + $0x28] sm:$0xff]
  %v49 = vld [vmem:[%s3 + $0x30] sm:$0xff]
  %v50 = vld [vmem:[%s3 + $0x38] sm:$0xff]
  %v52 = vsel %vm37, %v35, 0
  %54 = vmatprep.subr.mxu0 0.0
  %55 = vmatpush1.msra.mxu0 0.0
  %56 = vmatprep.subr.mxu0 0.0
  %57 = vmatpush1.msra.mxu0 0.0
  %58 = vmatprep.subr.mxu0 0.0
  %59 = vmatpush1.msra.mxu0 0.0
  %60 = vmatprep.subr.mxu0 0.0
  %61 = vmatpush1.msra.mxu0 0.0
  %62 = vmatprep.subr.mxu0 0.0
  %63 = vmatpush1.msra.mxu0 0.0
  %64 = vmatprep.subr.mxu0 0.0
  %65 = vmatpush1.msra.mxu0 0.0
  %66 = vmatprep.subr.mxu0 0.0
  %67 = vmatpush1.msra.mxu0 0.0
  %68 = vmatprep.subr.mxu0 0.0
  %69 = vmatpush1.msra.mxu0 0.0
  %70 = vmatprep.subr.mxu0 0.0
  %71 = vmatpush1.msra.mxu0 0.0
  %72 = vmatprep.subr.mxu0 0.0
  %73 = vmatpush1.msra.mxu0 0.0
  %74 = vmatprep.subr.mxu0 0.0
  %75 = vmatpush1.msra.mxu0 0.0
  %76 = vmatprep.subr.mxu0 0.0
  %77 = vmatpush1.msra.mxu0 0.0
  %78 = vmatprep.subr.mxu0 0.0
  %79 = vmatpush1.msra.mxu0 %v50
  %80 = vmatprep.subr.mxu0 0.0
  %81 = vmatpush1.msra.mxu0 %v49
  %82 = vmatprep.subr.mxu0 0.0
  %83 = vmatpush1.msra.mxu0 %v48
  %84 = vmatprep.subr.mxu0 0.0
  %85 = vmatpush1.msra.mxu0 %v47
  %86 = vmatprep.subr.mxu0 0.0
  %87 = vmatpush2.msra.mxu0 0.0
  %88 = vmatprep.subr.mxu0 0.0
  %89 = vmatpush2.msra.mxu0 0.0
  %90 = vmatprep.subr.mxu0 0.0
  %91 = vmatpush2.msra.mxu0 0.0
  %92 = vmatprep.subr.mxu0 0.0
  %93 = vmatpush2.msra.mxu0 0.0
  %94 = vmatprep.subr.mxu0 0.0
  %95 = vmatpush2.msra.mxu0 0.0
  %96 = vmatprep.subr.mxu0 0.0
  %97 = vmatpush2.msra.mxu0 0.0
  %98 = vmatprep.subr.mxu0 0.0
  %99 = vmatpush2.msra.mxu0 0.0
  %100 = vmatprep.subr.mxu0 0.0
  %101 = vmatpush2.msra.mxu0 0.0
  %102 = vmatprep.subr.mxu0 0.0
  %103 = vmatpush2.msra.mxu0 0.0
  %104 = vmatprep.subr.mxu0 0.0
  %105 = vmatpush2.msra.mxu0 0.0
  %106 = vmatprep.subr.mxu0 0.0
  %107 = vmatpush2.msra.mxu0 0.0
  %108 = vmatprep.subr.mxu0 0.0
  %109 = vmatpush2.msra.mxu0 0.0
  %110 = vmatprep.subr.mxu0 0.0
  %111 = vmatpush2.msra.mxu0 0.0
  %112 = vmatprep.subr.mxu0 0.0
  %113 = vmatpush2.msra.mxu0 0.0
  %114 = vmatprep.subr.mxu0 0.0
  %115 = vmatpush2.msra.mxu0 0.0
  %116 = vmatprep.subr.mxu0 0.0
  %117 = vmatpush2.msra.mxu0 0.0
  %118 = vmatprep.mubr.f32.mxu0 0.0
  %119 = vmatmul.mubr.f32.gmra.mxu0 %v52
  %v120 = vpop.f32.mrf.mxu0
  %v121 = vadd.f32 0.0, %v120
  %v122 = vpop.f32.mrf.mxu0
  %123 = vdwg.mxu0
  %v125 = vsel %vm37, %v34, 0
  %127 = vmatprep.subr.mxu0 0.0
  %128 = vmatpush1.msra.mxu0 0.0
  %129 = vmatprep.subr.mxu0 0.0
  %130 = vmatpush1.msra.mxu0 0.0
  %131 = vmatprep.subr.mxu0 0.0
  %132 = vmatpush1.msra.mxu0 0.0
  %133 = vmatprep.subr.mxu0 0.0
  %134 = vmatpush1.msra.mxu0 0.0
  %135 = vmatprep.subr.mxu0 0.0
  %136 = vmatpush1.msra.mxu0 0.0
  %137 = vmatprep.subr.mxu0 0.0
  %138 = vmatpush1.msra.mxu0 0.0
  %139 = vmatprep.subr.mxu0 0.0
  %140 = vmatpush1.msra.mxu0 0.0
  %141 = vmatprep.subr.mxu0 0.0
  %142 = vmatpush1.msra.mxu0 0.0
  %143 = vmatprep.subr.mxu0 0.0
  %144 = vmatpush1.msra.mxu0 0.0
  %145 = vmatprep.subr.mxu0 0.0
  %146 = vmatpush1.msra.mxu0 0.0
  %147 = vmatprep.subr.mxu0 0.0
  %148 = vmatpush1.msra.mxu0 0.0
  %149 = vmatprep.subr.mxu0 0.0
  %150 = vmatpush1.msra.mxu0 0.0
  %151 = vmatprep.subr.mxu0 0.0
  %152 = vmatpush1.msra.mxu0 %v46
  %153 = vmatprep.subr.mxu0 0.0
  %154 = vmatpush1.msra.mxu0 %v45
  %155 = vmatprep.subr.mxu0 0.0
  %156 = vmatpush1.msra.mxu0 %v44
  %157 = vmatprep.subr.mxu0 0.0
  %158 = vmatpush1.msra.mxu0 %v43
  %159 = vmatprep.subr.mxu0 0.0
  %160 = vmatpush2.msra.mxu0 0.0
  %161 = vmatprep.subr.mxu0 0.0
  %162 = vmatpush2.msra.mxu0 0.0
  %163 = vmatprep.subr.mxu0 0.0
  %164 = vmatpush2.msra.mxu0 0.0
  %165 = vmatprep.subr.mxu0 0.0
  %166 = vmatpush2.msra.mxu0 0.0
  %167 = vmatprep.subr.mxu0 0.0
  %168 = vmatpush2.msra.mxu0 0.0
  %169 = vmatprep.subr.mxu0 0.0
  %170 = vmatpush2.msra.mxu0 0.0
  %171 = vmatprep.subr.mxu0 0.0
  %172 = vmatpush2.msra.mxu0 0.0
  %173 = vmatprep.subr.mxu0 0.0
  %174 = vmatpush2.msra.mxu0 0.0
  %175 = vmatprep.subr.mxu0 0.0
  %176 = vmatpush2.msra.mxu0 0.0
  %177 = vmatprep.subr.mxu0 0.0
  %178 = vmatpush2.msra.mxu0 0.0
  %179 = vmatprep.subr.mxu0 0.0
  %180 = vmatpush2.msra.mxu0 0.0
  %181 = vmatprep.subr.mxu0 0.0
  %182 = vmatpush2.msra.mxu0 0.0
  %183 = vmatprep.subr.mxu0 0.0
  %184 = vmatpush2.msra.mxu0 0.0
  %185 = vmatprep.subr.mxu0 0.0
  %186 = vmatpush2.msra.mxu0 0.0
  %187 = vmatprep.subr.mxu0 0.0
  %188 = vmatpush2.msra.mxu0 0.0
  %189 = vmatprep.subr.mxu0 0.0
  %190 = vmatpush2.msra.mxu0 0.0
  %191 = vmatprep.mubr.f32.mxu0 0.0
  %192 = vmatmul.mubr.f32.gmra.mxu0 %v125
  %v193 = vpop.f32.mrf.mxu0
  %v194 = vadd.f32 %v121, %v193
  %v195 = vpop.f32.mrf.mxu0
  %196 = vdwg.mxu0
  %v197 = vld [vmem:[%s3 + $0x40] sm:$0xff]
  %v198 = vld [vmem:[%s3 + $0x48] sm:$0xff]
  %v199 = vld [vmem:[%s3 + $0x50] sm:$0xff]
  %v200 = vld [vmem:[%s3 + $0x58] sm:$0xff]
  %v202 = vsel %vm37, %v36, 0
  %204 = vmatprep.subr.mxu0 0.0
  %205 = vmatpush1.msra.mxu0 0.0
  %206 = vmatprep.subr.mxu0 0.0
  %207 = vmatpush1.msra.mxu0 0.0
  %208 = vmatprep.subr.mxu0 0.0
  %209 = vmatpush1.msra.mxu0 0.0
  %210 = vmatprep.subr.mxu0 0.0
  %211 = vmatpush1.msra.mxu0 0.0
  %212 = vmatprep.subr.mxu0 0.0
  %213 = vmatpush1.msra.mxu0 0.0
  %214 = vmatprep.subr.mxu0 0.0
  %215 = vmatpush1.msra.mxu0 0.0
  %216 = vmatprep.subr.mxu0 0.0
  %217 = vmatpush1.msra.mxu0 0.0
  %218 = vmatprep.subr.mxu0 0.0
  %219 = vmatpush1.msra.mxu0 0.0
  %220 = vmatprep.subr.mxu0 0.0
  %221 = vmatpush1.msra.mxu0 0.0
  %222 = vmatprep.subr.mxu0 0.0
  %223 = vmatpush1.msra.mxu0 0.0
  %224 = vmatprep.subr.mxu0 0.0
  %225 = vmatpush1.msra.mxu0 0.0
  %226 = vmatprep.subr.mxu0 0.0
  %227 = vmatpush1.msra.mxu0 0.0
  %228 = vmatprep.subr.mxu0 0.0
  %229 = vmatpush1.msra.mxu0 %v200
  %230 = vmatprep.subr.mxu0 0.0
  %231 = vmatpush1.msra.mxu0 %v199
  %232 = vmatprep.subr.mxu0 0.0
  %233 = vmatpush1.msra.mxu0 %v198
  %234 = vmatprep.subr.mxu0 0.0
  %235 = vmatpush1.msra.mxu0 %v197
  %236 = vmatprep.subr.mxu0 0.0
  %237 = vmatpush2.msra.mxu0 0.0
  %238 = vmatprep.subr.mxu0 0.0
  %239 = vmatpush2.msra.mxu0 0.0
  %240 = vmatprep.subr.mxu0 0.0
  %241 = vmatpush2.msra.mxu0 0.0
  %242 = vmatprep.subr.mxu0 0.0
  %243 = vmatpush2.msra.mxu0 0.0
  %244 = vmatprep.subr.mxu0 0.0
  %245 = vmatpush2.msra.mxu0 0.0
  %246 = vmatprep.subr.mxu0 0.0
  %247 = vmatpush2.msra.mxu0 0.0
  %248 = vmatprep.subr.mxu0 0.0
  %249 = vmatpush2.msra.mxu0 0.0
  %250 = vmatprep.subr.mxu0 0.0
  %251 = vmatpush2.msra.mxu0 0.0
  %252 = vmatprep.subr.mxu0 0.0
  %253 = vmatpush2.msra.mxu0 0.0
  %254 = vmatprep.subr.mxu0 0.0
  %255 = vmatpush2.msra.mxu0 0.0
  %256 = vmatprep.subr.mxu0 0.0
  %257 = vmatpush2.msra.mxu0 0.0
  %258 = vmatprep.subr.mxu0 0.0
  %259 = vmatpush2.msra.mxu0 0.0
  %260 = vmatprep.subr.mxu0 0.0
  %261 = vmatpush2.msra.mxu0 0.0
  %262 = vmatprep.subr.mxu0 0.0
  %263 = vmatpush2.msra.mxu0 0.0
  %264 = vmatprep.subr.mxu0 0.0
  %265 = vmatpush2.msra.mxu0 0.0
  %266 = vmatprep.subr.mxu0 0.0
  %267 = vmatpush2.msra.mxu0 0.0
  %268 = vmatprep.mubr.f32.mxu0 0.0
  %269 = vmatmul.mubr.f32.gmra.mxu0 %v202
  %v270 = vpop.f32.mrf.mxu0
  %v271 = vadd.f32 0.0, %v270
  %v272 = vpop.f32.mrf.mxu0
  %273 = vdwg.mxu0
  %v274 = vadd.f32 %v194, %v271
  %v275 = vld [vmem:[%s4] sm:$0x1]
  %v277 = vlaneseq
  %v278 = vshrl.u32 %v277, 7
  %v279 = vsub.s32 0, %v278
  %v280 = vrot.slane %v275, %v279
  %v282 = vadd.f32 %v274, %v280
  %v283 = vmax.f32 %v282, 0.0
  %v284 = vld [vmem:[%s5] sm:$0xff]
  %v285 = vld [vmem:[%s5 + $0x8] sm:$0xff]
  %v286 = vld [vmem:[%s5 + $0x10] sm:$0xff]
  %v287 = vld [vmem:[%s5 + $0x18] sm:$0xff]
  %v288 = vld [vmem:[%s5 + $0x20] sm:$0xff]
  %v289 = vld [vmem:[%s5 + $0x28] sm:$0xff]
  %v290 = vld [vmem:[%s5 + $0x30] sm:$0xff]
  %v291 = vld [vmem:[%s5 + $0x38] sm:$0xff]
  %v292 = vld [vmem:[%s6] sm:$0x1]
  %v294 = vlaneseq
  %v295 = vshrl.u32 %v294, 7
  %v296 = vsub.s32 0, %v295
  %v297 = vrot.slane %v292, %v296
  %vm299 = vcmask 523264
  %v301 = vsel %vm299, %v283, 0
  %303 = vmatprep.subr.mxu0 0.0
  %304 = vmatpush1.msra.mxu0 0.0
  %305 = vmatprep.subr.mxu0 0.0
  %306 = vmatpush1.msra.mxu0 0.0
  %307 = vmatprep.subr.mxu0 0.0
  %308 = vmatpush1.msra.mxu0 0.0
  %309 = vmatprep.subr.mxu0 0.0
  %310 = vmatpush1.msra.mxu0 0.0
  %311 = vmatprep.subr.mxu0 0.0
  %312 = vmatpush1.msra.mxu0 0.0
  %313 = vmatprep.subr.mxu0 0.0
  %314 = vmatpush1.msra.mxu0 0.0
  %315 = vmatprep.subr.mxu0 0.0
  %316 = vmatpush1.msra.mxu0 0.0
  %317 = vmatprep.subr.mxu0 0.0
  %318 = vmatpush1.msra.mxu0 0.0
  %319 = vmatprep.subr.mxu0 0.0
  %320 = vmatpush1.msra.mxu0 %v291
  %321 = vmatprep.subr.mxu0 0.0
  %322 = vmatpush1.msra.mxu0 %v290
  %323 = vmatprep.subr.mxu0 0.0
  %324 = vmatpush1.msra.mxu0 %v289
  %325 = vmatprep.subr.mxu0 0.0
  %326 = vmatpush1.msra.mxu0 %v288
  %327 = vmatprep.subr.mxu0 0.0
  %328 = vmatpush1.msra.mxu0 %v287
  %329 = vmatprep.subr.mxu0 0.0
  %330 = vmatpush1.msra.mxu0 %v286
  %331 = vmatprep.subr.mxu0 0.0
  %332 = vmatpush1.msra.mxu0 %v285
  %333 = vmatprep.subr.mxu0 0.0
  %334 = vmatpush1.msra.mxu0 %v284
  %335 = vmatprep.subr.mxu0 0.0
  %336 = vmatpush2.msra.mxu0 0.0
  %337 = vmatprep.subr.mxu0 0.0
  %338 = vmatpush2.msra.mxu0 0.0
  %339 = vmatprep.subr.mxu0 0.0
  %340 = vmatpush2.msra.mxu0 0.0
  %341 = vmatprep.subr.mxu0 0.0
  %342 = vmatpush2.msra.mxu0 0.0
  %343 = vmatprep.subr.mxu0 0.0
  %344 = vmatpush2.msra.mxu0 0.0
  %345 = vmatprep.subr.mxu0 0.0
  %346 = vmatpush2.msra.mxu0 0.0
  %347 = vmatprep.subr.mxu0 0.0
  %348 = vmatpush2.msra.mxu0 0.0
  %349 = vmatprep.subr.mxu0 0.0
  %350 = vmatpush2.msra.mxu0 0.0
  %351 = vmatprep.subr.mxu0 0.0
  %352 = vmatpush2.msra.mxu0 0.0
  %353 = vmatprep.subr.mxu0 0.0
  %354 = vmatpush2.msra.mxu0 0.0
  %355 = vmatprep.subr.mxu0 0.0
  %356 = vmatpush2.msra.mxu0 0.0
  %357 = vmatprep.subr.mxu0 0.0
  %358 = vmatpush2.msra.mxu0 0.0
  %359 = vmatprep.subr.mxu0 0.0
  %360 = vmatpush2.msra.mxu0 0.0
  %361 = vmatprep.subr.mxu0 0.0
  %362 = vmatpush2.msra.mxu0 0.0
  %363 = vmatprep.subr.mxu0 0.0
  %364 = vmatpush2.msra.mxu0 0.0
  %365 = vmatprep.subr.mxu0 0.0
  %366 = vmatpush2.msra.mxu0 0.0
  %367 = vmatprep.mubr.f32.mxu0 0.0
  %368 = vmatmul.mubr.f32.gmra.mxu0 %v301
  %v369 = vpop.f32.mrf.mxu0
  %v370 = vadd.f32 %v297, %v369
  %v371 = vpop.f32.mrf.mxu0
  %372 = vdwg.mxu0
  %v373 = vmax.f32 %v370, 0.0
  %v374 = vld [vmem:[%s7] sm:$0x1]
  %v376 = vlaneseq
  %v377 = vshrl.u32 %v376, 7
  %v378 = vsub.s32 0, %v377
  %v379 = vrot.slane %v374, %v378
  %v381 = vmul.f32 %v373, %v379
  %v382 = vsel %vm37, %v381, 0.0
  %383 = vadd.xlane.f32.xlu0 %v382
  %v384 = vpop.xlane.xlu0 %383
  %v385 = vld [vmem:[#allocation2] sm:$0x1]
  %v387 = vlaneseq
  %v388 = vshrl.u32 %v387, 7
  %v389 = vsub.s32 0, %v388
  %v390 = vrot.slane %v385, %v389
  %v392 = vadd.f32 %v384, %v390
  %vm393 = vcmask 7168
  %394 = vst.msk [vmem:[%s9] sm:$0xff] %vm393, %v42
  %396 = vrot.lane.b32.xlu0 %v392, 1
  %v397 = vpop.permute.xlu0 %396
  %vm399 = vcmask 15368
  %400 = vst.msk [vmem:[%s9] sm:$0xff] %vm399, %v397
  // Predicated region
  $region38: #{tpu_custom_call.1} parent=0 // pred_check
    _
  $region39: #{tpu_custom_call.1} parent=0 // pred_check_branch
    %402 = sbr.rel (0) target = $region41
  $region40: #{tpu_custom_call.1} parent=0 // pred_region
    _
  $region41: #{tpu_custom_call.1} parent=0 // pred_fallthru
    _
  // Predicated region
  $region42: #{tpu_custom_call.1} parent=0 // pred_check
    _
  $region43: #{tpu_custom_call.1} parent=0 // pred_check_branch
    %404 = sbr.rel (0) target = $region45
  $region44: #{tpu_custom_call.1} parent=0 // pred_region
    _
  $region45: #{tpu_custom_call.1} parent=0 // pred_fallthru
    _

</llo_original>
